<compile_context>
chip_gen: v5e
topology: v5e:2x2
jax: 0.10.0
libtpu: 0.0.40
codegen_flags: <defaults>
</compile_context>

<pallas_src>
import functools

import jax
import jax.numpy as jnp
from jax import lax
from jax.experimental import pallas as pl
from jax.experimental.pallas import tpu as pltpu

_PAD_DIR = (1.0, 0.0, 0.0, 1.0, 0.0, 0.0)  # safe unit forward / unit up padding


def _cdiv(a, b):
    return -(-a // b)


def _tpu_topology():
    """(physical VMEM bytes per core, #TensorCores per chip), safe fallbacks."""
    vmem_cap = 128 * 1024 * 1024
    num_tc = 1
    try:
        info = pltpu.get_tpu_info()
        vmem_cap = int(getattr(info, "vmem_capacity_bytes", vmem_cap))
    except Exception:
        pass
    try:
        kind = str(getattr(jax.devices()[0], "device_kind", "")).lower()
        if any(tag in kind for tag in ("v7", "v4", "v5p")):
            num_tc = 2  # two TensorCores share the chip
    except Exception:
        pass
    return vmem_cap, num_tc


_VMEM_CAP_BYTES, _NUM_TC = _tpu_topology()


def _make_unity_kernel(T, SB, STRIP):
    """Kernel over one (6, SB, T, STRIP) block of pred and GT directions."""

    def kernel(pred_ref, real_ref, o_ref):
        j = pl.program_id(1)

        @pl.when(j == 0)
        def _init():
            o_ref[...] = jnp.zeros_like(o_ref)

        # Mask dropping the wrapped (t=0 <-> t=T-1) pair that pltpu.roll
        # introduces; hoisted out of the strip loop (JAX does not CSE iotas).
        t_keep = lax.broadcasted_iota(jnp.int32, (T, STRIP), 0) > 0

        def fold128(x):
            # (T, STRIP) -> (T, 128) with lane-aligned vreg adds (VALU only);
            # the expensive cross-lane reduction is deferred to the wrapper.
            acc = x[:, 0:128]
            for c in range(128, STRIP, 128):
                acc = acc + x[:, c:c + 128]
            return acc

        def strip_body(s, accs):
            a_acc, au_acc, n_acc, av_acc = accs

            def load(ref, c):
                return ref[c, s, :, :].astype(jnp.float32)

            # ---- forward direction -------------------------------------
            p0, p1, p2 = load(pred_ref, 0), load(pred_ref, 1), load(pred_ref, 2)
            ss_f = p0 * p0 + p1 * p1 + p2 * p2
            inv_f = lax.rsqrt(ss_f)                       # EUP slot
            n_acc = n_acc + fold128(jnp.abs(jnp.sqrt(ss_f) - 1.0))
            r0, r1, r2 = load(real_ref, 0), load(real_ref, 1), load(real_ref, 2)
            dot_f = (p0 * r0 + p1 * r1 + p2 * r2) * inv_f
            a_acc = a_acc + fold128(jnp.abs(dot_f - 1.0))

            # Temporal angle velocity (XLU sublane rotate, wrapped pair masked).
            pf0, pf1, pf2 = p0 * inv_f, p1 * inv_f, p2 * inv_f
            pav = (pf0 * pltpu.roll(pf0, 1, 0) + pf1 * pltpu.roll(pf1, 1, 0)
                   + pf2 * pltpu.roll(pf2, 1, 0))
            rav = (r0 * pltpu.roll(r0, 1, 0) + r1 * pltpu.roll(r1, 1, 0)
                   + r2 * pltpu.roll(r2, 1, 0))
            av_acc = av_acc + fold128(jnp.where(t_keep, jnp.abs(pav - rav), 0.0))

            # ---- up direction (normalization folded into the dot) -------
            p3, p4, p5 = load(pred_ref, 3), load(pred_ref, 4), load(pred_ref, 5)
            ss_u = p3 * p3 + p4 * p4 + p5 * p5
            inv_u = lax.rsqrt(ss_u)
            n_acc = n_acc + fold128(jnp.abs(jnp.sqrt(ss_u) - 1.0))
            r3, r4, r5 = load(real_ref, 3), load(real_ref, 4), load(real_ref, 5)
            dot_u = (p3 * r3 + p4 * r4 + p5 * r5) * inv_u
            au_acc = au_acc + fold128(jnp.abs(dot_u - 1.0))

            return (a_acc, au_acc, n_acc, av_acc)

        zero = jnp.zeros((T, 128), jnp.float32)
        a_acc, au_acc, n_acc, av_acc = lax.fori_loop(
            0, SB, strip_body, (zero, zero, zero, zero))

        # Lane-dense vector partials accumulated into the resident output block
        # (no per-step iota/where scalar placement).
        o_ref[0, 0] += a_acc
        o_ref[0, 1] += au_acc
        o_ref[0, 2] += n_acc
        o_ref[0, 3] += av_acc

    return kernel


def _component_major(x, S_pad, STRIP):
    """(N, T, J, 6) -> (6, S_pad, T, STRIP); padded lanes = safe unit dirs."""
    N, T, J, _ = x.shape
    NJ = N * J
    x = jnp.transpose(x, (3, 1, 0, 2)).reshape(6, T, NJ)
    pad_cols = S_pad * STRIP - NJ
    if pad_cols:
        pad = jnp.broadcast_to(
            jnp.asarray(_PAD_DIR, dtype=x.dtype).reshape(6, 1, 1),
            (6, T, pad_cols))
        x = jnp.concatenate([x, pad], axis=-1)
    return jnp.transpose(x.reshape(6, T, S_pad, STRIP), (0, 2, 1, 3))


@functools.partial(jax.jit, static_argnames=("max_block_strips", "force_par"))
def unity_loss(preds_dir_fu, real_dir_fu, *, max_block_strips=None, force_par=None):
    """preds_dir_fu / real_dir_fu: [N, T, J, 6] (forward xyz, up xyz)."""
    N, T, J, C = preds_dir_fu.shape
    assert C == 6 and T >= 2
    NJ = N * J
    itemsize = jnp.dtype(preds_dir_fu.dtype).itemsize

    # Strip width: full 128-lane density; T*STRIP ~= 2048 elements keeps every
    # live (T, STRIP) intermediate at <= 2 vregs so the strip body never spills.
    STRIP = 256 if T <= 16 else 128
    # TODO(synk): very long sequences (T in the thousands) additionally want a
    # T-tiling grid axis carrying the boundary frame; not needed for pose-length T.

    S_total = _cdiv(NJ, STRIP)

    # 2-way TensorCore split only on multi-TC chips (v7x / megacore); padding
    # guarantees an even split so neither core idles.
    if force_par is not None:
        PAR = max(1, int(force_par))
    else:
        PAR = 2 if (_NUM_TC >= 2 and S_total >= 2) else 1

    # Block size (strips per grid step) from a per-generation VMEM budget:
    # 2 inputs x 2 pipeline buffers resident; ~4 MiB per input block makes each
    # grid step's DMA (~8 MiB) dwarf the ~0.35 us fixed per-step overhead while
    # staying comfortable inside v7x's 64 MiB physical VMEM.
    vmem_budget = min(_VMEM_CAP_BYTES // 2, 64 * 1024 * 1024)
    per_block_budget = min(4 * 1024 * 1024, vmem_budget // 4)
    strip_bytes = 6 * T * STRIP * itemsize
    sb_cap = max(1, per_block_budget // strip_bytes)
    if max_block_strips is not None:
        sb_cap = max(1, min(sb_cap, int(max_block_strips)))

    per_par = _cdiv(S_total, PAR)
    BP = _cdiv(per_par, sb_cap)      # accumulation steps per parallel slice
    SB = _cdiv(per_par, BP)          # strips per grid step (minimal padding)
    S_pad = PAR * BP * SB

    pred_cm = _component_major(preds_dir_fu, S_pad, STRIP)
    real_cm = _component_major(real_dir_fu, S_pad, STRIP)
    # TODO(synk): this relayout is one extra fused HBM pass per tensor; a
    # producer emitting the (6, S, T, STRIP) layout directly (or bf16 staging)
    # would remove it for this mem-bound reduction.

    in_spec = pl.BlockSpec((6, SB, T, STRIP), lambda i, j: (0, i * BP + j, 0, 0))
    out_spec = pl.BlockSpec((1, 4, T, 128), lambda i, j: (i, 0, 0, 0))

    elems = S_pad * STRIP * T
    cost = pl.CostEstimate(
        flops=55 * elems,
        transcendentals=4 * elems,
        bytes_accessed=2 * 6 * elems * itemsize + PAR * 4 * T * 128 * 4)

    partial_sums = pl.pallas_call(
        _make_unity_kernel(T, SB, STRIP),
        out_shape=jax.ShapeDtypeStruct((PAR, 4, T, 128), jnp.float32),
        grid=(PAR, BP),
        in_specs=[in_spec, in_spec],
        out_specs=out_spec,
        compiler_params=pltpu.CompilerParams(
            dimension_semantics=("parallel", "arbitrary"),
            vmem_limit_bytes=int(vmem_budget)),
        cost_estimate=cost,
    )(pred_cm, real_cm)

    sums = jnp.sum(partial_sums, axis=(0, 2, 3))     # (4,) loss partial sums
    m = jnp.float32(N * T * J)
    m_av = jnp.float32(N * (T - 1) * J)
    return {
        "loss_a": sums[0] / m,
        "loss_a_up": sums[1] / m,
        "loss_norm": sums[2] / m,
        "loss_av": sums[3] / m_av,
        "loss_3d_pos": jnp.float32(0.0),
    }


def unity_loss_ref(preds_dir_fu, real_dir_fu):
    """Pure-JAX reference mirroring the PyTorch forward."""
    N, T, J, _ = preds_dir_fu.shape
    pd = preds_dir_fu.astype(jnp.float32).reshape(-1, 6)
    rd = real_dir_fu.astype(jnp.float32).reshape(-1, 6)
    pf, pu = pd[:, :3], pd[:, 3:]
    rf, ru = rd[:, :3], rd[:, 3:]
    lf = jnp.linalg.norm(pf, axis=-1, keepdims=True)
    lu = jnp.linalg.norm(pu, axis=-1, keepdims=True)
    pfn, pun = pf / lf, pu / lu
    loss_a = jnp.mean(jnp.abs((pfn * rf).sum(axis=1) - 1.0))
    loss_a_up = jnp.mean(jnp.abs((pun * ru).sum(axis=1) - 1.0))
    loss_norm = jnp.mean(jnp.abs(lf - 1.0)) + jnp.mean(jnp.abs(lu - 1.0))
    pdir = pfn.reshape(N, T, J, 3)
    rdir = rf.reshape(N, T, J, 3)
    pav = (pdir[:, 1:] * pdir[:, :-1]).sum(-1)
    rav = (rdir[:, 1:] * rdir[:, :-1]).sum(-1)
    loss_av = jnp.mean(jnp.abs(pav - rav))
    return {
        "loss_a": loss_a,
        "loss_a_up": loss_a_up,
        "loss_norm": loss_norm,
        "loss_av": loss_av,
        "loss_3d_pos": jnp.float32(0.0),
    }


if __name__ == "__main__":
    key = jax.random.PRNGKey(0)

    def make_inputs(k, N, T, J):
        k1, k2 = jax.random.split(k)
        preds = jax.random.normal(k1, (N, T, J, 6), dtype=jnp.float32)
        gt = jax.random.normal(k2, (N, T, J, 6), dtype=jnp.float32)
        gt_f = gt[..., :3] / jnp.linalg.norm(gt[..., :3], axis=-1, keepdims=True)
        gt_u = gt[..., 3:] / jnp.linalg.norm(gt[..., 3:], axis=-1, keepdims=True)
        return preds, jnp.concatenate([gt_f, gt_u], axis=-1)

    names = ("loss_a", "loss_a_up", "loss_norm", "loss_av", "loss_3d_pos")
    # (N, T, J): tiny case plus one with lane padding; each is also run with a
    # forced 2-way parallel split and small blocks to exercise the multi-step
    # accumulation (BP > 1) path used on big inputs / v7x.
    for case, (N, T, J) in enumerate([(2, 8, 4), (64, 8, 25)]):
        preds, real = make_inputs(jax.random.fold_in(key, case), N, T, J)
        ref = unity_loss_ref(preds, real)
        for kwargs in ({}, {"max_block_strips": 2, "force_par": 2}):
            out = unity_loss(preds, real, **kwargs)
            out = jax.tree_util.tree_map(jax.block_until_ready, out)
            for name in names:
                assert jnp.allclose(out[name], ref[name], atol=1e-4, rtol=1e-4), (
                    name, (N, T, J), kwargs, float(out[name]), float(ref[name]))

    print("KERNEL_OK")
</pallas_src>

<mosaic_0001>
module attributes {stable_mosaic.version = 11 : i64} {
  func.func @kernel(%arg0: i32, %arg1: i32, %arg2: memref<6x1x8x256xf32, #tpu.memory_space<vmem>>, %arg3: memref<6x1x8x256xf32, #tpu.memory_space<vmem>>, %arg4: memref<1x4x8x128xf32, #tpu.memory_space<vmem>>) attributes {dimension_semantics = [#tpu.dimension_semantics<parallel>, #tpu.dimension_semantics<arbitrary>], iteration_bounds = array<i64: 1, 1>, scalar_prefetch = 0 : i64, scratch_operands = 0 : i64, tpu.core_type = #tpu.core_type<tc>, window_params = [{transform_indices = @transform_0, window_bounds = array<i64: 6, 1, 8, 256>}, {transform_indices = @transform_1, window_bounds = array<i64: 6, 1, 8, 256>}, {transform_indices = @transform_2, window_bounds = array<i64: 1, 4, 8, 128>}]} {
    %c0_i32 = arith.constant 0 : i32
    %0 = arith.cmpi eq, %arg1, %c0_i32 : i32
    %1 = arith.extui %0 : i1 to i32
    %c0_i32_0 = arith.constant 0 : i32
    %2 = arith.cmpi ne, %1, %c0_i32_0 : i32
    scf.if %2 {
      %cst_76 = arith.constant 0.000000e+00 : f32
      %148 = vector.broadcast %cst_76 : f32 to vector<1x4x8x128xf32>
      %c0_77 = arith.constant 0 : index
      %c0_78 = arith.constant 0 : index
      %c0_79 = arith.constant 0 : index
      %c0_80 = arith.constant 0 : index
      %149 = vector.load %arg4[%c0_77, %c0_78, %c0_79, %c0_80] : memref<1x4x8x128xf32, #tpu.memory_space<vmem>>, vector<1x4x8x128xf32>
      tpu.vector_store %arg4[%c0_77, %c0_78, %c0_79, %c0_80], %148 {strides = array<i32>} : memref<1x4x8x128xf32, #tpu.memory_space<vmem>>, vector<1x4x8x128xf32>,
    } else {
    }
    %3 = tpu.iota {dimensions = array<i32: 0>} : vector<8x256xi32>
    %c0_i32_1 = arith.constant 0 : i32
    %4 = vector.broadcast %c0_i32_1 : i32 to vector<8x256xi32>
    %5 = arith.cmpi sgt, %3, %4 : vector<8x256xi32>
    %cst = arith.constant 0.000000e+00 : f32
    %6 = vector.broadcast %cst : f32 to vector<8x128xf32>
    %c0_i32_2 = arith.constant 0 : i32
    %c0 = arith.constant 0 : index
    %7 = arith.index_cast %c0_i32_2 : i32 to index
    %c0_3 = arith.constant 0 : index
    %c0_4 = arith.constant 0 : index
    %8 = vector.load %arg2[%c0, %7, %c0_3, %c0_4] : memref<6x1x8x256xf32, #tpu.memory_space<vmem>>, vector<1x1x8x256xf32>
    %9 = vector.shape_cast %8 : vector<1x1x8x256xf32> to vector<8x256xf32>
    %c1 = arith.constant 1 : index
    %10 = arith.index_cast %c0_i32_2 : i32 to index
    %c0_5 = arith.constant 0 : index
    %c0_6 = arith.constant 0 : index
    %11 = vector.load %arg2[%c1, %10, %c0_5, %c0_6] : memref<6x1x8x256xf32, #tpu.memory_space<vmem>>, vector<1x1x8x256xf32>
    %12 = vector.shape_cast %11 : vector<1x1x8x256xf32> to vector<8x256xf32>
    %c2 = arith.constant 2 : index
    %13 = arith.index_cast %c0_i32_2 : i32 to index
    %c0_7 = arith.constant 0 : index
    %c0_8 = arith.constant 0 : index
    %14 = vector.load %arg2[%c2, %13, %c0_7, %c0_8] : memref<6x1x8x256xf32, #tpu.memory_space<vmem>>, vector<1x1x8x256xf32>
    %15 = vector.shape_cast %14 : vector<1x1x8x256xf32> to vector<8x256xf32>
    %16 = arith.mulf %9, %9 : vector<8x256xf32>
    %17 = arith.mulf %12, %12 : vector<8x256xf32>
    %18 = arith.addf %16, %17 : vector<8x256xf32>
    %19 = arith.mulf %15, %15 : vector<8x256xf32>
    %20 = arith.addf %18, %19 : vector<8x256xf32>
    %21 = math.rsqrt %20 : vector<8x256xf32>
    %22 = math.sqrt %20 : vector<8x256xf32>
    %cst_9 = arith.constant 1.000000e+00 : f32
    %23 = vector.broadcast %cst_9 : f32 to vector<8x256xf32>
    %24 = arith.subf %22, %23 : vector<8x256xf32>
    %25 = math.absf %24 : vector<8x256xf32>
    %26 = vector.extract_strided_slice %25 {offsets = [0, 0], sizes = [8, 128], strides = [1, 1]} : vector<8x256xf32> to vector<8x128xf32>
    %27 = vector.extract_strided_slice %25 {offsets = [0, 128], sizes = [8, 128], strides = [1, 1]} : vector<8x256xf32> to vector<8x128xf32>
    %28 = arith.addf %26, %27 : vector<8x128xf32>
    %29 = arith.addf %6, %28 : vector<8x128xf32>
    %c0_10 = arith.constant 0 : index
    %30 = arith.index_cast %c0_i32_2 : i32 to index
    %c0_11 = arith.constant 0 : index
    %c0_12 = arith.constant 0 : index
    %31 = vector.load %arg3[%c0_10, %30, %c0_11, %c0_12] : memref<6x1x8x256xf32, #tpu.memory_space<vmem>>, vector<1x1x8x256xf32>
    %32 = vector.shape_cast %31 : vector<1x1x8x256xf32> to vector<8x256xf32>
    %c1_13 = arith.constant 1 : index
    %33 = arith.index_cast %c0_i32_2 : i32 to index
    %c0_14 = arith.constant 0 : index
    %c0_15 = arith.constant 0 : index
    %34 = vector.load %arg3[%c1_13, %33, %c0_14, %c0_15] : memref<6x1x8x256xf32, #tpu.memory_space<vmem>>, vector<1x1x8x256xf32>
    %35 = vector.shape_cast %34 : vector<1x1x8x256xf32> to vector<8x256xf32>
    %c2_16 = arith.constant 2 : index
    %36 = arith.index_cast %c0_i32_2 : i32 to index
    %c0_17 = arith.constant 0 : index
    %c0_18 = arith.constant 0 : index
    %37 = vector.load %arg3[%c2_16, %36, %c0_17, %c0_18] : memref<6x1x8x256xf32, #tpu.memory_space<vmem>>, vector<1x1x8x256xf32>
    %38 = vector.shape_cast %37 : vector<1x1x8x256xf32> to vector<8x256xf32>
    %39 = arith.mulf %9, %32 : vector<8x256xf32>
    %40 = arith.mulf %12, %35 : vector<8x256xf32>
    %41 = arith.addf %39, %40 : vector<8x256xf32>
    %42 = arith.mulf %15, %38 : vector<8x256xf32>
    %43 = arith.addf %41, %42 : vector<8x256xf32>
    %44 = arith.mulf %43, %21 : vector<8x256xf32>
    %cst_19 = arith.constant 1.000000e+00 : f32
    %45 = vector.broadcast %cst_19 : f32 to vector<8x256xf32>
    %46 = arith.subf %44, %45 : vector<8x256xf32>
    %47 = math.absf %46 : vector<8x256xf32>
    %48 = vector.extract_strided_slice %47 {offsets = [0, 0], sizes = [8, 128], strides = [1, 1]} : vector<8x256xf32> to vector<8x128xf32>
    %49 = vector.extract_strided_slice %47 {offsets = [0, 128], sizes = [8, 128], strides = [1, 1]} : vector<8x256xf32> to vector<8x128xf32>
    %50 = arith.addf %48, %49 : vector<8x128xf32>
    %51 = arith.addf %6, %50 : vector<8x128xf32>
    %52 = arith.mulf %9, %21 : vector<8x256xf32>
    %53 = arith.mulf %12, %21 : vector<8x256xf32>
    %54 = arith.mulf %15, %21 : vector<8x256xf32>
    %c1_i32 = arith.constant 1 : i32
    %55 = tpu.dynamic_rotate %52 by %c1_i32 dim 0 : vector<8x256xf32>, i32 -> vector<8x256xf32>
    %56 = arith.mulf %52, %55 : vector<8x256xf32>
    %c1_i32_20 = arith.constant 1 : i32
    %57 = tpu.dynamic_rotate %53 by %c1_i32_20 dim 0 : vector<8x256xf32>, i32 -> vector<8x256xf32>
    %58 = arith.mulf %53, %57 : vector<8x256xf32>
    %59 = arith.addf %56, %58 : vector<8x256xf32>
    %c1_i32_21 = arith.constant 1 : i32
    %60 = tpu.dynamic_rotate %54 by %c1_i32_21 dim 0 : vector<8x256xf32>, i32 -> vector<8x256xf32>
    %61 = arith.mulf %54, %60 : vector<8x256xf32>
    %62 = arith.addf %59, %61 : vector<8x256xf32>
    %c1_i32_22 = arith.constant 1 : i32
    %63 = tpu.dynamic_rotate %32 by %c1_i32_22 dim 0 : vector<8x256xf32>, i32 -> vector<8x256xf32>
    %64 = arith.mulf %32, %63 : vector<8x256xf32>
    %c1_i32_23 = arith.constant 1 : i32
    %65 = tpu.dynamic_rotate %35 by %c1_i32_23 dim 0 : vector<8x256xf32>, i32 -> vector<8x256xf32>
    %66 = arith.mulf %35, %65 : vector<8x256xf32>
    %67 = arith.addf %64, %66 : vector<8x256xf32>
    %c1_i32_24 = arith.constant 1 : i32
    %68 = tpu.dynamic_rotate %38 by %c1_i32_24 dim 0 : vector<8x256xf32>, i32 -> vector<8x256xf32>
    %69 = arith.mulf %38, %68 : vector<8x256xf32>
    %70 = arith.addf %67, %69 : vector<8x256xf32>
    %71 = arith.subf %62, %70 : vector<8x256xf32>
    %72 = math.absf %71 : vector<8x256xf32>
    %cst_25 = arith.constant 0.000000e+00 : f32
    %73 = vector.broadcast %cst_25 : f32 to vector<8x256xf32>
    %74 = arith.select %5, %72, %73 : vector<8x256xi1>, vector<8x256xf32>
    %75 = vector.extract_strided_slice %74 {offsets = [0, 0], sizes = [8, 128], strides = [1, 1]} : vector<8x256xf32> to vector<8x128xf32>
    %76 = vector.extract_strided_slice %74 {offsets = [0, 128], sizes = [8, 128], strides = [1, 1]} : vector<8x256xf32> to vector<8x128xf32>
    %77 = arith.addf %75, %76 : vector<8x128xf32>
    %78 = arith.addf %6, %77 : vector<8x128xf32>
    %c3 = arith.constant 3 : index
    %79 = arith.index_cast %c0_i32_2 : i32 to index
    %c0_26 = arith.constant 0 : index
    %c0_27 = arith.constant 0 : index
    %80 = vector.load %arg2[%c3, %79, %c0_26, %c0_27] : memref<6x1x8x256xf32, #tpu.memory_space<vmem>>, vector<1x1x8x256xf32>
    %81 = vector.shape_cast %80 : vector<1x1x8x256xf32> to vector<8x256xf32>
    %c4 = arith.constant 4 : index
    %82 = arith.index_cast %c0_i32_2 : i32 to index
    %c0_28 = arith.constant 0 : index
    %c0_29 = arith.constant 0 : index
    %83 = vector.load %arg2[%c4, %82, %c0_28, %c0_29] : memref<6x1x8x256xf32, #tpu.memory_space<vmem>>, vector<1x1x8x256xf32>
    %84 = vector.shape_cast %83 : vector<1x1x8x256xf32> to vector<8x256xf32>
    %c5 = arith.constant 5 : index
    %85 = arith.index_cast %c0_i32_2 : i32 to index
    %c0_30 = arith.constant 0 : index
    %c0_31 = arith.constant 0 : index
    %86 = vector.load %arg2[%c5, %85, %c0_30, %c0_31] : memref<6x1x8x256xf32, #tpu.memory_space<vmem>>, vector<1x1x8x256xf32>
    %87 = vector.shape_cast %86 : vector<1x1x8x256xf32> to vector<8x256xf32>
    %88 = arith.mulf %81, %81 : vector<8x256xf32>
    %89 = arith.mulf %84, %84 : vector<8x256xf32>
    %90 = arith.addf %88, %89 : vector<8x256xf32>
    %91 = arith.mulf %87, %87 : vector<8x256xf32>
    %92 = arith.addf %90, %91 : vector<8x256xf32>
    %93 = math.rsqrt %92 : vector<8x256xf32>
    %94 = math.sqrt %92 : vector<8x256xf32>
    %cst_32 = arith.constant 1.000000e+00 : f32
    %95 = vector.broadcast %cst_32 : f32 to vector<8x256xf32>
    %96 = arith.subf %94, %95 : vector<8x256xf32>
    %97 = math.absf %96 : vector<8x256xf32>
    %98 = vector.extract_strided_slice %97 {offsets = [0, 0], sizes = [8, 128], strides = [1, 1]} : vector<8x256xf32> to vector<8x128xf32>
    %99 = vector.extract_strided_slice %97 {offsets = [0, 128], sizes = [8, 128], strides = [1, 1]} : vector<8x256xf32> to vector<8x128xf32>
    %100 = arith.addf %98, %99 : vector<8x128xf32>
    %101 = arith.addf %29, %100 : vector<8x128xf32>
    %c3_33 = arith.constant 3 : index
    %102 = arith.index_cast %c0_i32_2 : i32 to index
    %c0_34 = arith.constant 0 : index
    %c0_35 = arith.constant 0 : index
    %103 = vector.load %arg3[%c3_33, %102, %c0_34, %c0_35] : memref<6x1x8x256xf32, #tpu.memory_space<vmem>>, vector<1x1x8x256xf32>
    %104 = vector.shape_cast %103 : vector<1x1x8x256xf32> to vector<8x256xf32>
    %c4_36 = arith.constant 4 : index
    %105 = arith.index_cast %c0_i32_2 : i32 to index
    %c0_37 = arith.constant 0 : index
    %c0_38 = arith.constant 0 : index
    %106 = vector.load %arg3[%c4_36, %105, %c0_37, %c0_38] : memref<6x1x8x256xf32, #tpu.memory_space<vmem>>, vector<1x1x8x256xf32>
    %107 = vector.shape_cast %106 : vector<1x1x8x256xf32> to vector<8x256xf32>
    %c5_39 = arith.constant 5 : index
    %108 = arith.index_cast %c0_i32_2 : i32 to index
    %c0_40 = arith.constant 0 : index
    %c0_41 = arith.constant 0 : index
    %109 = vector.load %arg3[%c5_39, %108, %c0_40, %c0_41] : memref<6x1x8x256xf32, #tpu.memory_space<vmem>>, vector<1x1x8x256xf32>
    %110 = vector.shape_cast %109 : vector<1x1x8x256xf32> to vector<8x256xf32>
    %111 = arith.mulf %81, %104 : vector<8x256xf32>
    %112 = arith.mulf %84, %107 : vector<8x256xf32>
    %113 = arith.addf %111, %112 : vector<8x256xf32>
    %114 = arith.mulf %87, %110 : vector<8x256xf32>
    %115 = arith.addf %113, %114 : vector<8x256xf32>
    %116 = arith.mulf %115, %93 : vector<8x256xf32>
    %cst_42 = arith.constant 1.000000e+00 : f32
    %117 = vector.broadcast %cst_42 : f32 to vector<8x256xf32>
    %118 = arith.subf %116, %117 : vector<8x256xf32>
    %119 = math.absf %118 : vector<8x256xf32>
    %120 = vector.extract_strided_slice %119 {offsets = [0, 0], sizes = [8, 128], strides = [1, 1]} : vector<8x256xf32> to vector<8x128xf32>
    %121 = vector.extract_strided_slice %119 {offsets = [0, 128], sizes = [8, 128], strides = [1, 1]} : vector<8x256xf32> to vector<8x128xf32>
    %122 = arith.addf %120, %121 : vector<8x128xf32>
    %123 = arith.addf %6, %122 : vector<8x128xf32>
    %c1_i32_43 = arith.constant 1 : i32
    %c0_44 = arith.constant 0 : index
    %c0_45 = arith.constant 0 : index
    %c0_46 = arith.constant 0 : index
    %c0_47 = arith.constant 0 : index
    %124 = vector.load %arg4[%c0_44, %c0_45, %c0_46, %c0_47] : memref<1x4x8x128xf32, #tpu.memory_space<vmem>>, vector<1x1x8x128xf32>
    %125 = vector.shape_cast %124 : vector<1x1x8x128xf32> to vector<8x128xf32>
    %126 = arith.addf %125, %51 : vector<8x128xf32>
    %c0_48 = arith.constant 0 : index
    %c0_49 = arith.constant 0 : index
    %c0_50 = arith.constant 0 : index
    %c0_51 = arith.constant 0 : index
    %127 = vector.load %arg4[%c0_48, %c0_49, %c0_50, %c0_51] : memref<1x4x8x128xf32, #tpu.memory_space<vmem>>, vector<1x1x8x128xf32>
    %128 = vector.shape_cast %127 : vector<1x1x8x128xf32> to vector<8x128xf32>
    %129 = vector.shape_cast %126 : vector<8x128xf32> to vector<1x1x8x128xf32>
    tpu.vector_store %arg4[%c0_48, %c0_49, %c0_50, %c0_51], %129 {strides = array<i32>} : memref<1x4x8x128xf32, #tpu.memory_space<vmem>>, vector<1x1x8x128xf32>,
    %c0_52 = arith.constant 0 : index
    %c1_53 = arith.constant 1 : index
    %c0_54 = arith.constant 0 : index
    %c0_55 = arith.constant 0 : index
    %130 = vector.load %arg4[%c0_52, %c1_53, %c0_54, %c0_55] : memref<1x4x8x128xf32, #tpu.memory_space<vmem>>, vector<1x1x8x128xf32>
    %131 = vector.shape_cast %130 : vector<1x1x8x128xf32> to vector<8x128xf32>
    %132 = arith.addf %131, %123 : vector<8x128xf32>
    %c0_56 = arith.constant 0 : index
    %c1_57 = arith.constant 1 : index
    %c0_58 = arith.constant 0 : index
    %c0_59 = arith.constant 0 : index
    %133 = vector.load %arg4[%c0_56, %c1_57, %c0_58, %c0_59] : memref<1x4x8x128xf32, #tpu.memory_space<vmem>>, vector<1x1x8x128xf32>
    %134 = vector.shape_cast %133 : vector<1x1x8x128xf32> to vector<8x128xf32>
    %135 = vector.shape_cast %132 : vector<8x128xf32> to vector<1x1x8x128xf32>
    tpu.vector_store %arg4[%c0_56, %c1_57, %c0_58, %c0_59], %135 {strides = array<i32>} : memref<1x4x8x128xf32, #tpu.memory_space<vmem>>, vector<1x1x8x128xf32>,
    %c0_60 = arith.constant 0 : index
    %c2_61 = arith.constant 2 : index
    %c0_62 = arith.constant 0 : index
    %c0_63 = arith.constant 0 : index
    %136 = vector.load %arg4[%c0_60, %c2_61, %c0_62, %c0_63] : memref<1x4x8x128xf32, #tpu.memory_space<vmem>>, vector<1x1x8x128xf32>
    %137 = vector.shape_cast %136 : vector<1x1x8x128xf32> to vector<8x128xf32>
    %138 = arith.addf %137, %101 : vector<8x128xf32>
    %c0_64 = arith.constant 0 : index
    %c2_65 = arith.constant 2 : index
    %c0_66 = arith.constant 0 : index
    %c0_67 = arith.constant 0 : index
    %139 = vector.load %arg4[%c0_64, %c2_65, %c0_66, %c0_67] : memref<1x4x8x128xf32, #tpu.memory_space<vmem>>, vector<1x1x8x128xf32>
    %140 = vector.shape_cast %139 : vector<1x1x8x128xf32> to vector<8x128xf32>
    %141 = vector.shape_cast %138 : vector<8x128xf32> to vector<1x1x8x128xf32>
    tpu.vector_store %arg4[%c0_64, %c2_65, %c0_66, %c0_67], %141 {strides = array<i32>} : memref<1x4x8x128xf32, #tpu.memory_space<vmem>>, vector<1x1x8x128xf32>,
    %c0_68 = arith.constant 0 : index
    %c3_69 = arith.constant 3 : index
    %c0_70 = arith.constant 0 : index
    %c0_71 = arith.constant 0 : index
    %142 = vector.load %arg4[%c0_68, %c3_69, %c0_70, %c0_71] : memref<1x4x8x128xf32, #tpu.memory_space<vmem>>, vector<1x1x8x128xf32>
    %143 = vector.shape_cast %142 : vector<1x1x8x128xf32> to vector<8x128xf32>
    %144 = arith.addf %143, %78 : vector<8x128xf32>
    %c0_72 = arith.constant 0 : index
    %c3_73 = arith.constant 3 : index
    %c0_74 = arith.constant 0 : index
    %c0_75 = arith.constant 0 : index
    %145 = vector.load %arg4[%c0_72, %c3_73, %c0_74, %c0_75] : memref<1x4x8x128xf32, #tpu.memory_space<vmem>>, vector<1x1x8x128xf32>
    %146 = vector.shape_cast %145 : vector<1x1x8x128xf32> to vector<8x128xf32>
    %147 = vector.shape_cast %144 : vector<8x128xf32> to vector<1x1x8x128xf32>
    tpu.vector_store %arg4[%c0_72, %c3_73, %c0_74, %c0_75], %147 {strides = array<i32>} : memref<1x4x8x128xf32, #tpu.memory_space<vmem>>, vector<1x1x8x128xf32>,
    return
  }
  func.func @transform_0(%arg0: i32, %arg1: i32) -> (i32, i32, i32, i32) {
    %c1_i32 = arith.constant 1 : i32
    %0 = arith.muli %arg0, %c1_i32 : i32
    %1 = arith.addi %0, %arg1 : i32
    %c0_i32 = arith.constant 0 : i32
    %c0_i32_0 = arith.constant 0 : i32
    %c0_i32_1 = arith.constant 0 : i32
    %c0_i32_2 = arith.constant 0 : i32
    return %c0_i32, %1, %c0_i32_0, %c0_i32_1 : i32, i32, i32, i32
  }
  func.func @transform_1(%arg0: i32, %arg1: i32) -> (i32, i32, i32, i32) {
    %c1_i32 = arith.constant 1 : i32
    %0 = arith.muli %arg0, %c1_i32 : i32
    %1 = arith.addi %0, %arg1 : i32
    %c0_i32 = arith.constant 0 : i32
    %c0_i32_0 = arith.constant 0 : i32
    %c0_i32_1 = arith.constant 0 : i32
    %c0_i32_2 = arith.constant 0 : i32
    return %c0_i32, %1, %c0_i32_0, %c0_i32_1 : i32, i32, i32, i32
  }
  func.func @transform_2(%arg0: i32, %arg1: i32) -> (i32, i32, i32, i32) {
    %c0_i32 = arith.constant 0 : i32
    %c0_i32_0 = arith.constant 0 : i32
    %c0_i32_1 = arith.constant 0 : i32
    %c0_i32_2 = arith.constant 0 : i32
    return %arg0, %c0_i32, %c0_i32_0, %c0_i32_1 : i32, i32, i32, i32
  }
}

</mosaic_0001>

<llo_original>
// kernel: unity_loss.1
$region0: #{unity_loss.1}
  #allocation0 [shape = 'u32[]', space=smem, size = 0x4, offset = 0x4, fixed_abs, tag = 'smem constant byte address 0x4 - core index']
  #allocation1 [shape = 'u32[72,128]{1,0:T(1,128)}', space=vmem, size = 0x9000, scoped, tag = 'internal scratch']
  %s0 = inlined_call_operand.vmem [shape: f32[6,1,8,256], index: 0, kind: input, shape index: {}]
  %s1 = inlined_call_operand.vmem [shape: f32[6,1,8,256], index: 1, kind: input, shape index: {}]
  %s2 = inlined_call_operand.vmem [shape: f32[1,4,8,128], index: 2, kind: output, shape index: {}]
  %s3 = sld [smem:[#allocation0]]
  $region22: #{unity_loss.1} parent=0
    _
  %s5 = ssub.s32 1, %s3
  %s6 = scalar_select 0, %s5, %s3
  // Predicated region
  $region2: #{unity_loss.1} parent=0 // pred_check
    _
  $region3: #{unity_loss.1} parent=0 // pred_check_branch
    %8 = sbr.rel (0) target = $region5
  $region4: #{unity_loss.1} parent=0 // pred_region
    %s9 = sadd.s32 0, 0
    %p10 = scmp.lt.s32.totalorder %s9, 0
    %s11 = scalar_select %p10, %s9, 0
    %s12 = smul.addr %s11, 2
    %s13 = smul.addr %s12, 8
    %s14 = scalar_lea.vmem %s0, %s13
    %s15 = sadd.s32 0, 0
  $region5: #{unity_loss.1} parent=0 // pred_fallthru
    _
  // Predicated region
  $region6: #{unity_loss.1} parent=0 // pred_check
    _
  $region7: #{unity_loss.1} parent=0 // pred_check_branch
    %17 = sbr.rel (0) target = $region9
  $region8: #{unity_loss.1} parent=0 // pred_region
    %s18 = sadd.s32 0, 0
    %p19 = scmp.lt.s32.totalorder %s18, 0
    %s20 = scalar_select %p19, %s18, 0
    %s21 = smul.addr %s20, 2
    %s22 = smul.addr %s21, 8
    %s23 = scalar_lea.vmem %s1, %s22
    %s24 = sadd.s32 0, 0
  $region9: #{unity_loss.1} parent=0 // pred_fallthru
    _
  %s25 = sadd.s32 0, 0
  %p26 = scmp.lt.s32.totalorder %s25, 0
  %s27 = scalar_select %p26, %s25, 0
  %s28 = smul.addr %s27, 2
  %s29 = smul.addr %s28, 8
  %s30 = scalar_lea.vmem %s0, %s29
  %s31 = sadd.s32 0, 0
  %p32 = scmp.lt.s32.totalorder %s31, 0
  %s33 = scalar_select %p32, %s31, 0
  %s34 = smul.addr %s33, 2
  %s35 = smul.addr %s34, 8
  %s36 = scalar_lea.vmem %s1, %s35
  %s37 = sadd.s32 0, 0
  %p38 = scmp.lt.s32.totalorder %s37, 0
  %s39 = scalar_select %p38, %s37, 0
  %s40 = smul.addr %s39, 2
  %s41 = smul.addr %s40, 8
  %s42 = scalar_lea.vmem %s0, %s41
  %s43 = sadd.s32 0, 0
  %s44 = sadd.s32 0, 0
  %p45 = scmp.lt.s32.totalorder %s44, 0
  %s46 = scalar_select %p45, %s44, 0
  %s47 = smul.addr %s46, 2
  %s48 = smul.addr %s47, 8
  %s49 = scalar_lea.vmem %s1, %s48
  %s50 = sadd.s32 0, 0
  %p51 = scmp.eq.s32.totalorder 0, 0
  // Predicated region
  $region10: #{unity_loss.1} parent=0 // pred_check
    %p52 = pneg %p51
  $region11: #{unity_loss.1} parent=0 // pred_check_branch
    %54 = sbr.rel (%p52) target = $region13
  $region12: #{unity_loss.1} parent=0 // pred_region
    %55 = vst [vmem:[%s2] sm:$0xff] 0.0
    %56 = vst [vmem:[%s2 + $0x8] sm:$0xff] 0.0
    %57 = vst [vmem:[%s2 + $0x10] sm:$0xff] 0.0
    %58 = vst [vmem:[%s2 + $0x18] sm:$0xff] 0.0
  $region13: #{unity_loss.1} parent=0 // pred_fallthru
    _
  %v59 = vlaneseq
  %v60 = vshrl.u32 %v59, 7
  %vm61 = vcmp.gt.s32.totalorder %v60, 0
  %v62 = vld [vmem:[%s42] sm:$0xff]
  %v63 = vld [vmem:[%s42 + $0x8] sm:$0xff]
  %s64 = scalar_lea.vmem %s42, 16
  %v65 = vld [vmem:[%s64] sm:$0xff]
  %v66 = vld [vmem:[%s64 + $0x8] sm:$0xff]
  %s67 = scalar_lea.vmem %s42, 32
  %v68 = vld [vmem:[%s67] sm:$0xff]
  %v69 = vld [vmem:[%s67 + $0x8] sm:$0xff]
  %v70 = vmul.f32 %v62, %v62
  %v71 = vmul.f32 %v63, %v63
  %v72 = vmul.f32 %v65, %v65
  %v73 = vmul.f32 %v66, %v66
  %v74 = vadd.f32 %v70, %v72
  %v75 = vadd.f32 %v71, %v73
  %v76 = vmul.f32 %v68, %v68
  %v77 = vmul.f32 %v69, %v69
  %v78 = vadd.f32 %v74, %v76
  %v79 = vadd.f32 %v75, %v77
  %v80 = vrsqrt.pop %v78
  %v81 = vmul.f32 %v80, %v78
  %v82 = vmul.f32 %v81, %v80
  %v83 = vmul.f32 0.5, %v82
  %v84 = vsub.f32 1.5, %v83
  %v85 = vmul.f32 %v80, %v84
  %vm86 = vweird.f32 %v78
  %vm87 = vweird.f32 %v80
  %vm88 = vmor %vm86, %vm87
  %v89 = vsel %vm88, %v80, %v85
  %v90 = vrsqrt.pop %v79
  %v91 = vmul.f32 %v90, %v79
  %v92 = vmul.f32 %v91, %v90
  %v93 = vmul.f32 0.5, %v92
  %v94 = vsub.f32 1.5, %v93
  %v95 = vmul.f32 %v90, %v94
  %vm96 = vweird.f32 %v79
  %vm97 = vweird.f32 %v90
  %vm98 = vmor %vm96, %vm97
  %v99 = vsel %vm98, %v90, %v95
  %v100 = vrsqrt.pop %v78
  %v101 = vmul.f32 %v100, %v78
  %v102 = vmul.f32 %v101, %v100
  %v103 = vmul.f32 0.5, %v102
  %v104 = vsub.f32 1.5, %v103
  %v105 = vmul.f32 %v100, %v104
  %v106 = vmul.f32 %v78, %v105
  %vm107 = vcmp.eq.f32.partialorder %v78, inf
  %v108 = vsel %vm107, %v78, %v106
  %vm109 = vcmp.eq.f32.partialorder %v78, 0.0
  %v110 = vand.u32 %v78, 2147483648
  %v111 = vsel %vm109, %v110, %v108
  %v112 = vrsqrt.pop %v79
  %v113 = vmul.f32 %v112, %v79
  %v114 = vmul.f32 %v113, %v112
  %v115 = vmul.f32 0.5, %v114
  %v116 = vsub.f32 1.5, %v115
  %v117 = vmul.f32 %v112, %v116
  %v118 = vmul.f32 %v79, %v117
  %vm119 = vcmp.eq.f32.partialorder %v79, inf
  %v120 = vsel %vm119, %v79, %v118
  %vm121 = vcmp.eq.f32.partialorder %v79, 0.0
  %v122 = vand.u32 %v79, 2147483648
  %v123 = vsel %vm121, %v122, %v120
  %v124 = vsub.f32 %v111, 1.0
  %v125 = vsub.f32 %v123, 1.0
  %v126 = vand.u32 2147483647, %v124
  %v127 = vand.u32 2147483647, %v125
  %v128 = vadd.f32 %v126, %v127
  %v129 = vadd.f32 %v128, 0.0
  %v130 = vld [vmem:[%s49] sm:$0xff]
  %v131 = vld [vmem:[%s49 + $0x8] sm:$0xff]
  %s132 = scalar_lea.vmem %s49, 16
  %v133 = vld [vmem:[%s132] sm:$0xff]
  %v134 = vld [vmem:[%s132 + $0x8] sm:$0xff]
  %s135 = scalar_lea.vmem %s49, 32
  %v136 = vld [vmem:[%s135] sm:$0xff]
  %v137 = vld [vmem:[%s135 + $0x8] sm:$0xff]
  %v138 = vmul.f32 %v62, %v130
  %v139 = vmul.f32 %v63, %v131
  %v140 = vmul.f32 %v65, %v133
  %v141 = vmul.f32 %v66, %v134
  %v142 = vadd.f32 %v138, %v140
  %v143 = vadd.f32 %v139, %v141
  %v144 = vmul.f32 %v68, %v136
  %v145 = vmul.f32 %v69, %v137
  %v146 = vadd.f32 %v142, %v144
  %v147 = vadd.f32 %v143, %v145
  %v148 = vmul.f32 %v146, %v89
  %v149 = vmul.f32 %v147, %v99
  %v150 = vsub.f32 %v148, 1.0
  %v151 = vsub.f32 %v149, 1.0
  %v152 = vand.u32 2147483647, %v150
  %v153 = vand.u32 2147483647, %v151
  %v154 = vadd.f32 %v152, %v153
  %v155 = vadd.f32 %v154, 0.0
  %v156 = vmul.f32 %v62, %v89
  %v157 = vmul.f32 %v63, %v99
  %v158 = vmul.f32 %v65, %v89
  %v159 = vmul.f32 %v66, %v99
  %v160 = vmul.f32 %v68, %v89
  %v161 = vmul.f32 %v69, %v99
  %v162 = vrot.slane %v156, 7
  %v163 = vrot.slane %v157, 7
  %v164 = vmul.f32 %v156, %v162
  %v165 = vmul.f32 %v157, %v163
  %v166 = vrot.slane %v158, 7
  %v167 = vrot.slane %v159, 7
  %v168 = vmul.f32 %v158, %v166
  %v169 = vmul.f32 %v159, %v167
  %v170 = vadd.f32 %v164, %v168
  %v171 = vadd.f32 %v165, %v169
  %v172 = vrot.slane %v160, 7
  %v173 = vrot.slane %v161, 7
  %v174 = vmul.f32 %v160, %v172
  %v175 = vmul.f32 %v161, %v173
  %v176 = vadd.f32 %v170, %v174
  %v177 = vadd.f32 %v171, %v175
  %v178 = vrot.slane %v130, 7
  %v179 = vrot.slane %v131, 7
  %v180 = vmul.f32 %v130, %v178
  %v181 = vmul.f32 %v131, %v179
  %v182 = vrot.slane %v133, 7
  %v183 = vrot.slane %v134, 7
  %v184 = vmul.f32 %v133, %v182
  %v185 = vmul.f32 %v134, %v183
  %v186 = vadd.f32 %v180, %v184
  %v187 = vadd.f32 %v181, %v185
  %v188 = vrot.slane %v136, 7
  %v189 = vrot.slane %v137, 7
  %v190 = vmul.f32 %v136, %v188
  %v191 = vmul.f32 %v137, %v189
  %v192 = vadd.f32 %v186, %v190
  %v193 = vadd.f32 %v187, %v191
  %v194 = vsub.f32 %v176, %v192
  %v195 = vsub.f32 %v177, %v193
  %v196 = vand.u32 2147483647, %v194
  %v197 = vand.u32 2147483647, %v195
  %v198 = vsel %vm61, %v196, 0.0
  %v199 = vsel %vm61, %v197, 0.0
  %v200 = vadd.f32 %v198, %v199
  %v201 = vadd.f32 %v200, 0.0
  %s202 = scalar_lea.vmem %s42, 48
  %v203 = vld [vmem:[%s202] sm:$0xff]
  %v204 = vld [vmem:[%s202 + $0x8] sm:$0xff]
  %s205 = scalar_lea.vmem %s42, 64
  %v206 = vld [vmem:[%s205] sm:$0xff]
  %v207 = vld [vmem:[%s205 + $0x8] sm:$0xff]
  %s208 = scalar_lea.vmem %s42, 80
  %v209 = vld [vmem:[%s208] sm:$0xff]
  %v210 = vld [vmem:[%s208 + $0x8] sm:$0xff]
  %v211 = vmul.f32 %v203, %v203
  %v212 = vmul.f32 %v204, %v204
  %v213 = vmul.f32 %v206, %v206
  %v214 = vmul.f32 %v207, %v207
  %v215 = vadd.f32 %v211, %v213
  %v216 = vadd.f32 %v212, %v214
  %v217 = vmul.f32 %v209, %v209
  %v218 = vmul.f32 %v210, %v210
  %v219 = vadd.f32 %v215, %v217
  %v220 = vadd.f32 %v216, %v218
  %v221 = vrsqrt.pop %v219
  %v222 = vmul.f32 %v221, %v219
  %v223 = vmul.f32 %v222, %v221
  %v224 = vmul.f32 0.5, %v223
  %v225 = vsub.f32 1.5, %v224
  %v226 = vmul.f32 %v221, %v225
  %vm227 = vweird.f32 %v219
  %vm228 = vweird.f32 %v221
  %vm229 = vmor %vm227, %vm228
  %v230 = vsel %vm229, %v221, %v226
  %v231 = vrsqrt.pop %v220
  %v232 = vmul.f32 %v231, %v220
  %v233 = vmul.f32 %v232, %v231
  %v234 = vmul.f32 0.5, %v233
  %v235 = vsub.f32 1.5, %v234
  %v236 = vmul.f32 %v231, %v235
  %vm237 = vweird.f32 %v220
  %vm238 = vweird.f32 %v231
  %vm239 = vmor %vm237, %vm238
  %v240 = vsel %vm239, %v231, %v236
  %v241 = vrsqrt.pop %v219
  %v242 = vmul.f32 %v241, %v219
  %v243 = vmul.f32 %v242, %v241
  %v244 = vmul.f32 0.5, %v243
  %v245 = vsub.f32 1.5, %v244
  %v246 = vmul.f32 %v241, %v245
  %v247 = vmul.f32 %v219, %v246
  %vm248 = vcmp.eq.f32.partialorder %v219, inf
  %v249 = vsel %vm248, %v219, %v247
  %vm250 = vcmp.eq.f32.partialorder %v219, 0.0
  %v251 = vand.u32 %v219, 2147483648
  %v252 = vsel %vm250, %v251, %v249
  %v253 = vrsqrt.pop %v220
  %v254 = vmul.f32 %v253, %v220
  %v255 = vmul.f32 %v254, %v253
  %v256 = vmul.f32 0.5, %v255
  %v257 = vsub.f32 1.5, %v256
  %v258 = vmul.f32 %v253, %v257
  %v259 = vmul.f32 %v220, %v258
  %vm260 = vcmp.eq.f32.partialorder %v220, inf
  %v261 = vsel %vm260, %v220, %v259
  %vm262 = vcmp.eq.f32.partialorder %v220, 0.0
  %v263 = vand.u32 %v220, 2147483648
  %v264 = vsel %vm262, %v263, %v261
  %v265 = vsub.f32 %v252, 1.0
  %v266 = vsub.f32 %v264, 1.0
  %v267 = vand.u32 2147483647, %v265
  %v268 = vand.u32 2147483647, %v266
  %v269 = vadd.f32 %v267, %v268
  %v270 = vadd.f32 %v129, %v269
  %s271 = scalar_lea.vmem %s49, 48
  %v272 = vld [vmem:[%s271] sm:$0xff]
  %v273 = vld [vmem:[%s271 + $0x8] sm:$0xff]
  %s274 = scalar_lea.vmem %s49, 64
  %v275 = vld [vmem:[%s274] sm:$0xff]
  %v276 = vld [vmem:[%s274 + $0x8] sm:$0xff]
  %s277 = scalar_lea.vmem %s49, 80
  %v278 = vld [vmem:[%s277] sm:$0xff]
  %v279 = vld [vmem:[%s277 + $0x8] sm:$0xff]
  %v280 = vmul.f32 %v203, %v272
  %v281 = vmul.f32 %v204, %v273
  %v282 = vmul.f32 %v206, %v275
  %v283 = vmul.f32 %v207, %v276
  %v284 = vadd.f32 %v280, %v282
  %v285 = vadd.f32 %v281, %v283
  %v286 = vmul.f32 %v209, %v278
  %v287 = vmul.f32 %v210, %v279
  %v288 = vadd.f32 %v284, %v286
  %v289 = vadd.f32 %v285, %v287
  %v290 = vmul.f32 %v288, %v230
  %v291 = vmul.f32 %v289, %v240
  %v292 = vsub.f32 %v290, 1.0
  %v293 = vsub.f32 %v291, 1.0
  %v294 = vand.u32 2147483647, %v292
  %v295 = vand.u32 2147483647, %v293
  %v296 = vadd.f32 %v294, %v295
  %v297 = vadd.f32 %v296, 0.0
  %v298 = vld [vmem:[%s2] sm:$0xff]
  %v299 = vadd.f32 %v298, %v155
  %300 = vst [vmem:[%s2] sm:$0xff] %v299
  %s301 = scalar_lea.vmem %s2, 8
  %v302 = vld [vmem:[%s301] sm:$0xff]
  %v303 = vadd.f32 %v302, %v297
  %304 = vst [vmem:[%s301] sm:$0xff] %v303
  %s305 = scalar_lea.vmem %s2, 16
  %v306 = vld [vmem:[%s305] sm:$0xff]
  %v307 = vadd.f32 %v306, %v270
  %308 = vst [vmem:[%s305] sm:$0xff] %v307
  %s309 = scalar_lea.vmem %s2, 24
  %v310 = vld [vmem:[%s309] sm:$0xff]
  %v311 = vadd.f32 %v310, %v201
  %312 = vst [vmem:[%s309] sm:$0xff] %v311
  // Predicated region
  $region14: #{unity_loss.1} parent=0 // pred_check
    _
  $region15: #{unity_loss.1} parent=0 // pred_check_branch
    %314 = sbr.rel (0) target = $region17
  $region16: #{unity_loss.1} parent=0 // pred_region
    _
  $region17: #{unity_loss.1} parent=0 // pred_fallthru
    _
  // Predicated region
  $region18: #{unity_loss.1} parent=0 // pred_check
    _
  $region19: #{unity_loss.1} parent=0 // pred_check_branch
    %316 = sbr.rel (0) target = $region21
  $region20: #{unity_loss.1} parent=0 // pred_region
    _
  $region21: #{unity_loss.1} parent=0 // pred_fallthru
    _

</llo_original>
